<compile_context>
chip_gen: v7x
topology: tpu7x:2x2x1
jax: 0.10.0
libtpu: 0.0.40
codegen_flags: <defaults>
</compile_context>

<pallas_src>
import jax
import jax.numpy as jnp
import numpy as np
from jax.experimental import pallas as pl
from jax.experimental.pallas import tpu as pltpu

N_JOINTS_TOTAL = 33   # channels produced by the pose net
N_JOINTS_COCO = 17    # channels kept by out.narrow(1, 0, 17)
KH = KW = 3
M_PAD = 24            # 17 output rows padded to a multiple of 8 sublanes

# Mscoco flipRef = ((2,3),(4,5),...,(16,17)) (1-indexed pairs) -> 0-indexed perm
COCO_FLIP_PERM = np.array(
    [0, 2, 1, 4, 3, 6, 5, 8, 7, 10, 9, 12, 11, 14, 13, 16, 15], dtype=np.int32
)


# ----------------------------------------------------------------------------
# Fused kernel: one GEMM does conv + flip-branch + shuffleLR + average + bias
# ----------------------------------------------------------------------------
def _fused_kernel(w_ref, cols_ref, o_ref):
    # w_ref:    (M_PAD, Kp) bf16  rows [0,17) = 0.5*(W_direct + W_flip-folded),
    #                             column K holds the pre-averaged bias,
    #                             padded rows/columns are zero.
    # cols_ref: (Kp, TILE)  bf16  im2col columns for TILE batch*spatial points
    #                             (row K is all-ones -> bias term).
    # o_ref:    (M_PAD, TILE) f32 averaged heatmaps (rows >=17 are junk/zero).
    o_ref[...] = jnp.dot(w_ref[...], cols_ref[...],
                         preferred_element_type=jnp.float32)


# ----------------------------------------------------------------------------
# InferenNet.forward
#   out      = pyranet(x)[:, :17]
#   flip_out = flip(shuffleLR(pyranet(flip(x))[:, :17]))
#   return (flip_out + out) / 2
# ----------------------------------------------------------------------------
def inferen_net_forward(x, weight, bias):
    N, Cin, H, W = x.shape
    HW = H * W
    NHW = N * HW
    K = Cin * KH * KW
    Kp = ((K + 1 + 7) // 8) * 8          # +1 bias row, pad to sublane multiple

    perm = COCO_FLIP_PERM

    # --- pre-averaged weights / bias (one-time setup, f32) -------------------
    w17 = weight[:N_JOINTS_COCO]
    b17 = bias[:N_JOINTS_COCO]
    wa = w17.reshape(N_JOINTS_COCO, K)                        # direct branch
    wb = w17[perm][:, :, :, ::-1].reshape(N_JOINTS_COCO, K)   # shuffleLR+flip_w
    w_avg = 0.5 * (wa + wb)
    b_avg = 0.5 * (b17 + b17[perm])

    wmat = jnp.zeros((M_PAD, Kp), jnp.float32)
    wmat = wmat.at[:N_JOINTS_COCO, :K].set(w_avg)
    wmat = wmat.at[:N_JOINTS_COCO, K].set(b_avg)              # bias column

    # --- single im2col pass, batch folded into the lane dimension ------------
    xp = jnp.pad(x, ((0, 0), (0, 0), (1, 1), (1, 1)))
    patches = [xp[:, :, kh:kh + H, kw:kw + W]
               for kh in range(KH) for kw in range(KW)]
    cols = jnp.stack(patches, axis=2).reshape(N, K, HW)       # (N, Cin*9, HW)
    cols = cols.transpose(1, 0, 2).reshape(K, NHW)            # (K, N*HW)
    ones_row = jnp.ones((1, NHW), jnp.float32)                # bias row at K
    pad_rows = jnp.zeros((Kp - K - 1, NHW), jnp.float32)
    cols = jnp.concatenate([cols, ones_row, pad_rows], axis=0)  # (Kp, N*HW)

    # bf16 MXU operands; accumulation stays f32 via preferred_element_type
    wmat = wmat.astype(jnp.bfloat16)
    cols = cols.astype(jnp.bfloat16)

    TILE = min(NHW, 512)                 # one lane-dense GEMM at this size
    grid = (NHW // TILE,)

    out_flat = pl.pallas_call(
        _fused_kernel,
        out_shape=jax.ShapeDtypeStruct((M_PAD, NHW), jnp.float32),
        grid_spec=pltpu.PrefetchScalarGridSpec(
            num_scalar_prefetch=0,
            grid=grid,
            in_specs=[
                pl.BlockSpec((M_PAD, Kp), lambda t: (0, 0)),
                pl.BlockSpec((Kp, TILE), lambda t: (0, t)),
            ],
            out_specs=pl.BlockSpec((M_PAD, TILE), lambda t: (0, t)),
        ),
        compiler_params=pltpu.CompilerParams(
            dimension_semantics=("arbitrary",)),
    )(wmat, cols)

    # Narrow padded rows to 17 joints and restore (N, 17, H, W)
    out = out_flat[:N_JOINTS_COCO].reshape(N_JOINTS_COCO, N, H, W)
    return out.transpose(1, 0, 2, 3)


# ----------------------------------------------------------------------------
# Pure-JAX reference (mirrors the PyTorch forward literally) for validation
# ----------------------------------------------------------------------------
def reference_forward(x, weight, bias):
    def net(inp):
        y = jax.lax.conv_general_dilated(
            inp, weight, window_strides=(1, 1), padding="SAME",
            dimension_numbers=("NCHW", "OIHW", "NCHW"))
        return y + bias.reshape(1, -1, 1, 1)

    out = net(x)[:, :N_JOINTS_COCO]
    fo = net(x[:, :, :, ::-1])[:, :N_JOINTS_COCO]
    fo = fo[:, COCO_FLIP_PERM]                           # shuffleLR
    fo = fo[:, :, :, ::-1]                               # flip
    return (fo + out) / 2.0


if __name__ == "__main__":
    key = jax.random.PRNGKey(0)
    kx, kw_, kb_ = jax.random.split(key, 3)

    # Small input consistent with pyranet's NCHW RGB input
    x = jax.random.normal(kx, (2, 3, 16, 16), dtype=jnp.float32)

    # Deterministic stand-in "pyranet" parameters (3x3 conv -> 33 heatmaps)
    weight = jax.random.normal(
        kw_, (N_JOINTS_TOTAL, 3, KH, KW), dtype=jnp.float32) * 0.1
    bias = jax.random.normal(kb_, (N_JOINTS_TOTAL,), dtype=jnp.float32) * 0.01

    result = jax.block_until_ready(inferen_net_forward(x, weight, bias))

    ref = reference_forward(x, weight, bias)
    assert result.shape == (2, N_JOINTS_COCO, 16, 16), result.shape
    # bf16 MXU operands (f32 accumulate) -> tolerance loosened accordingly
    assert jnp.allclose(result, ref, rtol=2e-2, atol=2e-2), "mismatch vs reference"

    print("KERNEL_OK")
</pallas_src>

<mosaic_0001>
module attributes {stable_mosaic.version = 11 : i64} {
  func.func @_fused_kernel(%arg0: i32, %arg1: memref<24x32xbf16, #tpu.memory_space<vmem>>, %arg2: memref<32x512xbf16, #tpu.memory_space<vmem>>, %arg3: memref<24x512xf32, #tpu.memory_space<vmem>>) attributes {dimension_semantics = [#tpu.dimension_semantics<arbitrary>], iteration_bounds = array<i64: 1>, scalar_prefetch = 0 : i64, scratch_operands = 0 : i64, tpu.core_type = #tpu.core_type<tc>, window_params = [{pipeline_mode = #tpu.pipeline_mode<synchronous>, transform_indices = @transform_0, window_bounds = array<i64: 24, 32>}, {transform_indices = @transform_1, window_bounds = array<i64: 32, 512>}, {transform_indices = @transform_2, window_bounds = array<i64: 24, 512>}]} {
    %c0 = arith.constant 0 : index
    %c0_0 = arith.constant 0 : index
    %0 = vector.load %arg1[%c0, %c0_0] : memref<24x32xbf16, #tpu.memory_space<vmem>>, vector<24x32xbf16>
    %c0_1 = arith.constant 0 : index
    %c0_2 = arith.constant 0 : index
    %1 = vector.load %arg2[%c0_1, %c0_2] : memref<32x512xbf16, #tpu.memory_space<vmem>>, vector<32x512xbf16>
    %cst = arith.constant dense<0.000000e+00> : vector<24x512xf32>
    %2 = tpu.matmul %0, %1, %cst {dimension_numbers = #tpu.dot_dimension_numbers<[1], [0], [0], [1], [0, 0, 1, 1], [], []>} : vector<24x32xbf16>, vector<32x512xbf16>, vector<24x512xf32> -> vector<24x512xf32>
    %c0_3 = arith.constant 0 : index
    %c0_4 = arith.constant 0 : index
    %3 = vector.load %arg3[%c0_3, %c0_4] : memref<24x512xf32, #tpu.memory_space<vmem>>, vector<24x512xf32>
    tpu.vector_store %arg3[%c0_3, %c0_4], %2 {strides = array<i32>} : memref<24x512xf32, #tpu.memory_space<vmem>>, vector<24x512xf32>,
    return
  }
  func.func @transform_0(%arg0: i32) -> (i32, i32) {
    %c0_i32 = arith.constant 0 : i32
    %c0_i32_0 = arith.constant 0 : i32
    %c0_i32_1 = arith.constant 0 : i32
    return %c0_i32, %c0_i32_0 : i32, i32
  }
  func.func @transform_1(%arg0: i32) -> (i32, i32) {
    %c0_i32 = arith.constant 0 : i32
    %c0_i32_0 = arith.constant 0 : i32
    return %c0_i32, %arg0 : i32, i32
  }
  func.func @transform_2(%arg0: i32) -> (i32, i32) {
    %c0_i32 = arith.constant 0 : i32
    %c0_i32_0 = arith.constant 0 : i32
    return %c0_i32, %arg0 : i32, i32
  }
}

</mosaic_0001>

<llo_original>
// kernel: tpu_custom_call.1
$region0: #{tpu_custom_call.1}
  #allocation0 [shape = 'u32[]', space=smem, size = 0x4, offset = 0x4, fixed_abs, tag = 'smem constant byte address 0x4 - core index']
  #allocation1 [shape = 'u32[144,128]{1,0:T(1,128)}', space=vmem, size = 0x12000, scoped, tag = 'internal scratch']
  %s0 = inlined_call_operand.hbm [shape: bf16[24,32], index: 0, kind: input, shape index: {}]
  %s1 = inlined_call_operand.hbm [shape: bf16[32,512], index: 1, kind: input, shape index: {}]
  %s2 = inlined_call_operand.hbm [shape: f32[24,512], index: 2, kind: output, shape index: {}]
  %s3 = sld [smem:[#allocation0]]
  $region26: #{tpu_custom_call.1} parent=0
    _
  %s5 = ssub.s32 1, %s3
  %s6 = scalar_select 0, %s5, %s3
  $region1: #{tpu_custom_call.1} parent=0
    #allocation2 [shape = 'u8[6144]{0}', space=vmem, size = 0x1800, scoped, tag = 'input window, operand 0, single buffered']
    #allocation3 [shape = 's32[1]{0}', space=sflag, size = 0x4, scoped, tag = 'scoped memory for tpu_custom_call.1']
    #allocation4 [shape = 's32[1]{0}', space=sflag, size = 0x4, scoped, tag = 'scoped memory for tpu_custom_call.1']
    #allocation5 [shape = 'u8[32768]{0}', space=vmem, size = 0x8000, scoped, tag = 'input window, operand 1, single buffered']
    #allocation6 [shape = 's32[1]{0}', space=sflag, size = 0x4, scoped, tag = 'scoped memory for tpu_custom_call.1']
    #allocation7 [shape = 'u8[49152]{0}', space=vmem, size = 0xc000, scoped, tag = 'output window, operand 0, single buffered']
    %7 = vsyncpa [#allocation3], 0
    %8 = vsyncpa [#allocation6], 0
    %9 = vsyncpa [#allocation4], 0
    // Predicated region
    $region2: #{tpu_custom_call.1} parent=1 // pred_check
      _
    $region3: #{tpu_custom_call.1} parent=1 // pred_check_branch
      %11 = sbr.rel (0) target = $region5
    $region4: #{tpu_custom_call.1} parent=1 // pred_region
      %s13 = ssub.s32 192, 192
      %14 = vsyncadd [#allocation3], %s13
      %s15 = sshll.u32 [#allocation2], 4
      %s16 = int_to_ptr.vmem [resolvable:$true] %s15
      %21 = dma.hbm_to_vmem [thread:$0]  %s0, 192, %s16, [#allocation3], 64, 64, 4
    $region5: #{tpu_custom_call.1} parent=1 // pred_fallthru
      _
    // Predicated region
    $region6: #{tpu_custom_call.1} parent=1 // pred_check
      _
    $region7: #{tpu_custom_call.1} parent=1 // pred_check_branch
      %23 = sbr.rel (0) target = $region9
    $region8: #{tpu_custom_call.1} parent=1 // pred_region
      %s25 = ssub.s32 1024, 1024
      %26 = vsyncadd [#allocation6], %s25
      %s27 = sshll.u32 [#allocation5], 4
      %s28 = int_to_ptr.vmem [resolvable:$true] %s27
      %33 = dma.hbm_to_vmem [thread:$0]  %s1, 1024, %s28, [#allocation6], 256, 256, 16
    $region9: #{tpu_custom_call.1} parent=1 // pred_fallthru
      _
    // Predicated region
    $region10: #{tpu_custom_call.1} parent=1 // pred_check
      _
    $region11: #{tpu_custom_call.1} parent=1 // pred_check_branch
      %35 = sbr.rel (0) target = $region13
    $region12: #{tpu_custom_call.1} parent=1 // pred_region
      %36 = dma.done [#allocation3], 192
    $region13: #{tpu_custom_call.1} parent=1 // pred_fallthru
      _
    // Predicated region
    $region14: #{tpu_custom_call.1} parent=1 // pred_check
      _
    $region15: #{tpu_custom_call.1} parent=1 // pred_check_branch
      %38 = sbr.rel (0) target = $region17
    $region16: #{tpu_custom_call.1} parent=1 // pred_region
      %39 = dma.done [#allocation6], 1024
    $region17: #{tpu_custom_call.1} parent=1 // pred_fallthru
      _
    %v41 = vld [vmem:[#allocation2] sm:$0xf]
    %v42 = vld [vmem:[#allocation2 + $0x4] sm:$0xf]
    %v43 = vld [vmem:[#allocation2 + $0x8] sm:$0xf]
    %v44 = vld [vmem:[#allocation5] sm:$0xff]
    %v45 = vld [vmem:[#allocation5 + $0x8] sm:$0xff]
    %v46 = vld [vmem:[#allocation5 + $0x10] sm:$0xff]
    %v47 = vld [vmem:[#allocation5 + $0x18] sm:$0xff]
    %v48 = vld [vmem:[#allocation5 + $0x20] sm:$0xff]
    %v49 = vld [vmem:[#allocation5 + $0x28] sm:$0xff]
    %v50 = vld [vmem:[#allocation5 + $0x30] sm:$0xff]
    %v51 = vld [vmem:[#allocation5 + $0x38] sm:$0xff]
    %v55 = vunpack.c.l.b16 %v41
    %v56 = vunpack.c.l.b16 %v42
    %v57 = vunpack.c.l.b16 %v43
    %v58 = vpack.c.b16 %v56, %v55
    %v59 = vpack.c.b16 %v57, %v57
    %v68 = vunpack.c.l.b16 %v44
    %v69 = vunpack.c.h.b16 %v44
    %v70 = vunpack.c.l.b16 %v45
    %v71 = vunpack.c.h.b16 %v45
    %v72 = vunpack.c.l.b16 %v46
    %v73 = vunpack.c.h.b16 %v46
    %v74 = vunpack.c.l.b16 %v47
    %v75 = vunpack.c.h.b16 %v47
    %v76 = vunpack.c.l.b16 %v48
    %v77 = vunpack.c.h.b16 %v48
    %v78 = vunpack.c.l.b16 %v49
    %v79 = vunpack.c.h.b16 %v49
    %v80 = vunpack.c.l.b16 %v50
    %v81 = vunpack.c.h.b16 %v50
    %v82 = vunpack.c.l.b16 %v51
    %v83 = vunpack.c.h.b16 %v51
    %v84 = vpack.c.b16 %v72, %v68
    %v85 = vpack.c.b16 %v73, %v69
    %v86 = vpack.c.b16 %v74, %v70
    %v87 = vpack.c.b16 %v75, %v71
    %v88 = vpack.c.b16 %v80, %v76
    %v89 = vpack.c.b16 %v81, %v77
    %v90 = vpack.c.b16 %v82, %v78
    %v91 = vpack.c.b16 %v83, %v79
    %vm100 = vcmask 261120
    %v102 = vsel %vm100, %v58, 0
    %v105 = vsel %vm100, %v59, 0
    %107 = vmatprep.subr.bf16.mxu0 %v85
    %108 = vmatpush1.bf16.msra.mxu0 %v84
    %109 = vmatprep.subr.bf16.mxu0 %v89
    %110 = vmatpush1.bf16.msra.mxu0 %v88
    %111 = vmatprep.subr.bf16.mxu0 0
    %112 = vmatpush1.bf16.msra.mxu0 0
    %113 = vmatprep.subr.bf16.mxu0 0
    %114 = vmatpush1.bf16.msra.mxu0 0
    %115 = vmatprep.subr.bf16.mxu0 0
    %116 = vmatpush1.bf16.msra.mxu0 0
    %117 = vmatprep.subr.bf16.mxu0 0
    %118 = vmatpush1.bf16.msra.mxu0 0
    %119 = vmatprep.subr.bf16.mxu0 0
    %120 = vmatpush1.bf16.msra.mxu0 0
    %121 = vmatprep.subr.bf16.mxu0 0
    %122 = vmatpush1.bf16.msra.mxu0 0
    %123 = vmatprep.subr.bf16.mxu0 0
    %124 = vmatpush1.bf16.msra.mxu0 0
    %125 = vmatprep.subr.bf16.mxu0 0
    %126 = vmatpush1.bf16.msra.mxu0 0
    %127 = vmatprep.subr.bf16.mxu0 0
    %128 = vmatpush1.bf16.msra.mxu0 0
    %129 = vmatprep.subr.bf16.mxu0 0
    %130 = vmatpush1.bf16.msra.mxu0 0
    %131 = vmatprep.subr.bf16.mxu0 0
    %132 = vmatpush1.bf16.msra.mxu0 0
    %133 = vmatprep.subr.bf16.mxu0 0
    %134 = vmatpush1.bf16.msra.mxu0 0
    %135 = vmatprep.subr.bf16.mxu0 0
    %136 = vmatpush1.bf16.msra.mxu0 0
    %137 = vmatprep.subr.bf16.mxu0 0
    %138 = vmatpush1.bf16.msra.mxu0 0
    %139 = vmatprep.mubr.bf16.mxu0 0
    %140 = vmatmul.mubr.bf16.gmra.mrb[0].mxu0 %v102
    %v141 = vpop.f32.mrb[0].mxu0
    %v142 = vadd.f32 0.0, %v141
    %v143 = vpop.f32.mrb[0].mxu0
    %v144 = vadd.f32 0.0, %v143
    %v145 = vpop.f32.mrb[0].mxu0
    %v146 = vadd.f32 0.0, %v145
    %v147 = vpop.f32.mrb[0].mxu0
    %v148 = vadd.f32 0.0, %v147
    %149 = vmatprep.mubr.bf16.mxu0 0
    %150 = vmatmul.mubr.bf16.gmra.mrb[0].mxu0 %v105
    %v151 = vpop.f32.mrb[0].mxu0
    %v152 = vadd.f32 0.0, %v151
    %v153 = vpop.f32.mrb[0].mxu0
    %v154 = vadd.f32 0.0, %v153
    %v155 = vpop.f32.mrb[0].mxu0
    %v156 = vpop.f32.mrb[0].mxu0
    %157 = vdwg.mxu0
    %158 = vmatprep.subr.bf16.mxu0 %v87
    %159 = vmatpush1.bf16.msra.mxu0 %v86
    %160 = vmatprep.subr.bf16.mxu0 %v91
    %161 = vmatpush1.bf16.msra.mxu0 %v90
    %162 = vmatprep.subr.bf16.mxu0 0
    %163 = vmatpush1.bf16.msra.mxu0 0
    %164 = vmatprep.subr.bf16.mxu0 0
    %165 = vmatpush1.bf16.msra.mxu0 0
    %166 = vmatprep.subr.bf16.mxu0 0
    %167 = vmatpush1.bf16.msra.mxu0 0
    %168 = vmatprep.subr.bf16.mxu0 0
    %169 = vmatpush1.bf16.msra.mxu0 0
    %170 = vmatprep.subr.bf16.mxu0 0
    %171 = vmatpush1.bf16.msra.mxu0 0
    %172 = vmatprep.subr.bf16.mxu0 0
    %173 = vmatpush1.bf16.msra.mxu0 0
    %174 = vmatprep.subr.bf16.mxu0 0
    %175 = vmatpush1.bf16.msra.mxu0 0
    %176 = vmatprep.subr.bf16.mxu0 0
    %177 = vmatpush1.bf16.msra.mxu0 0
    %178 = vmatprep.subr.bf16.mxu0 0
    %179 = vmatpush1.bf16.msra.mxu0 0
    %180 = vmatprep.subr.bf16.mxu0 0
    %181 = vmatpush1.bf16.msra.mxu0 0
    %182 = vmatprep.subr.bf16.mxu0 0
    %183 = vmatpush1.bf16.msra.mxu0 0
    %184 = vmatprep.subr.bf16.mxu0 0
    %185 = vmatpush1.bf16.msra.mxu0 0
    %186 = vmatprep.subr.bf16.mxu0 0
    %187 = vmatpush1.bf16.msra.mxu0 0
    %188 = vmatprep.subr.bf16.mxu0 0
    %189 = vmatpush1.bf16.msra.mxu0 0
    %190 = vmatprep.mubr.bf16.mxu0 0
    %191 = vmatmul.mubr.bf16.gmra.mrb[0].mxu0 %v102
    %v192 = vpop.f32.mrb[0].mxu0
    %v193 = vadd.f32 0.0, %v192
    %v194 = vpop.f32.mrb[0].mxu0
    %v195 = vadd.f32 0.0, %v194
    %v196 = vpop.f32.mrb[0].mxu0
    %v197 = vadd.f32 0.0, %v196
    %v198 = vpop.f32.mrb[0].mxu0
    %v199 = vadd.f32 0.0, %v198
    %200 = vmatprep.mubr.bf16.mxu0 0
    %201 = vmatmul.mubr.bf16.gmra.mrb[0].mxu0 %v105
    %v202 = vpop.f32.mrb[0].mxu0
    %v203 = vadd.f32 0.0, %v202
    %v204 = vpop.f32.mrb[0].mxu0
    %v205 = vadd.f32 0.0, %v204
    %v206 = vpop.f32.mrb[0].mxu0
    %v207 = vpop.f32.mrb[0].mxu0
    %208 = vdwg.mxu0
    %209 = vst [vmem:[#allocation7] sm:$0xff] %v142
    %210 = vst [vmem:[#allocation7 + $0x8] sm:$0xff] %v144
    %211 = vst [vmem:[#allocation7 + $0x10] sm:$0xff] %v193
    %212 = vst [vmem:[#allocation7 + $0x18] sm:$0xff] %v195
    %213 = vst [vmem:[#allocation7 + $0x20] sm:$0xff] %v146
    %214 = vst [vmem:[#allocation7 + $0x28] sm:$0xff] %v148
    %215 = vst [vmem:[#allocation7 + $0x30] sm:$0xff] %v197
    %216 = vst [vmem:[#allocation7 + $0x38] sm:$0xff] %v199
    %217 = vst [vmem:[#allocation7 + $0x40] sm:$0xff] %v152
    %218 = vst [vmem:[#allocation7 + $0x48] sm:$0xff] %v154
    %219 = vst [vmem:[#allocation7 + $0x50] sm:$0xff] %v203
    %220 = vst [vmem:[#allocation7 + $0x58] sm:$0xff] %v205
    // Predicated region
    $region18: #{tpu_custom_call.1} parent=1 // pred_check
      _
    $region19: #{tpu_custom_call.1} parent=1 // pred_check_branch
      %222 = sbr.rel (0) target = $region21
    $region20: #{tpu_custom_call.1} parent=1 // pred_region
      %s224 = ssub.s32 1536, 1536
      %225 = vsyncadd [#allocation4], %s224
      %s226 = sshll.u32 [#allocation7], 4
      %s227 = int_to_ptr.vmem [resolvable:$true] %s226
      %232 = dma.vmem_to_hbm [thread:$0]  %s227, 1536, %s2, [#allocation4], 512, 512, 32
    $region21: #{tpu_custom_call.1} parent=1 // pred_fallthru
      _
    // Predicated region
    $region22: #{tpu_custom_call.1} parent=1 // pred_check
      _
    $region23: #{tpu_custom_call.1} parent=1 // pred_check_branch
      %234 = sbr.rel (0) target = $region25
    $region24: #{tpu_custom_call.1} parent=1 // pred_region
      %235 = dma.done [#allocation4], 1536
    $region25: #{tpu_custom_call.1} parent=1 // pred_fallthru
      _
    %236 = vsyncpa [#allocation3], 1
    %237 = vsyncpa [#allocation6], 1
    %238 = vsyncpa [#allocation4], 1

</llo_original>
